<compile_context>
chip_gen: v7x
topology: tpu7x:2x2x1
jax: 0.10.0
libtpu: 0.0.40
codegen_flags: <defaults>
</compile_context>

<pallas_src>
import jax
import jax.numpy as jnp
from jax.experimental import pallas as pl
from jax.experimental.pallas import tpu as pltpu


def _make_sse_kernel(b_t, use_mxu):
    """Build the kernel for a (b_t, C, T) activation block.

    x_ref: (b_t, C, T) activations, storage dtype (VMEM)
    w_ref: (1, C) storage-dtype row   [MXU path]  or
           (C, 1) f32 column          [exact f32 VPU path]   (grid-invariant)
    b_ref: (1,)   f32 bias (SMEM scalar)
    o_ref: (b_t, C, T) output block
    """

    def kernel(x_ref, w_ref, b_ref, o_ref):
        bias = b_ref[0]
        w = w_ref[...]
        # b_t is small (<= 8): static unroll keeps every slice 2-D so the
        # channel reduce is a single matmul / sublane reduce per image.
        for i in range(b_t):
            x = x_ref[i]                                      # (C, T)
            if use_mxu:
                # bf16 etc.: MXU dot, exact multiplies + f32 accumulate,
                # no f32 materialization of the tile.
                s = jnp.dot(w, x, preferred_element_type=jnp.float32)  # (1, T)
            else:
                # f32: exact f32 multiply + cross-sublane reduce (VPU/XLU);
                # x is already f32 so no extra copy is created.
                s = jnp.sum(x * w, axis=0, keepdims=True)              # (1, T)
            gate = jax.nn.sigmoid(s + bias)                   # f32, EUP slot
            # Re-weight in the storage dtype (bf16 VALU on v6e/v7x; on v5e
            # the compiler upconverts per-vreg -- still no full f32 copy).
            o_ref[i] = (x * gate.astype(x.dtype)).astype(o_ref.dtype)

    return kernel


def _choose_tiles(B, C, HW, itemsize):
    """Pick (b_t, t_hw) batch/spatial tile sizes.

    Targets: ~2 MiB per input block (per-step overhead amortization),
    >= ~1 KiB per strided-DMA row, >= ~8 grid steps when the data allows it
    (2-TC sharding + pipelining on v7x), and a double-buffered in+out working
    set well under the 32 MiB scoped-VMEM limit (v7x has 64 MiB physical).
    """
    target_bytes = 2 * 1024 * 1024
    max_block_bytes = 4 * 1024 * 1024

    hw_ceil = pl.cdiv(HW, 128) * 128
    # Row floor: each of the C per-channel rows of the strided DMA >= ~1 KiB.
    lane_floor = min(hw_ceil, max(256, pl.cdiv(1024, itemsize)))
    lane_floor = pl.cdiv(lane_floor, 128) * 128

    # Largest lane-dense spatial tile under the per-block byte target.
    t_hw = (target_bytes // (C * itemsize)) // 128 * 128
    t_hw = max(lane_floor, min(max(t_hw, 128), hw_ceil))
    if C * t_hw * itemsize > max_block_bytes:          # very-large-C guard
        t_hw = max(128, (max_block_bytes // (C * itemsize)) // 128 * 128)
        t_hw = min(t_hw, hw_ceil)

    # Small C*HW: a full-HW tile is still far below target -> tile the batch
    # too so each DMA step carries more bytes (capped at 8 images/block so
    # the in-kernel unrolled loop stays short).
    b_t = 1
    if t_hw >= hw_ceil:
        per_image = C * hw_ceil * itemsize
        b_t = max(1, min(B, 8, target_bytes // max(1, per_image)))

    # Keep the grid deep enough for 2 TensorCores + double buffering.
    def steps(bt, thw):
        return pl.cdiv(B, bt) * pl.cdiv(HW, thw)

    while steps(b_t, t_hw) < 8 and b_t > 1:
        b_t = pl.cdiv(b_t, 2)
    while steps(b_t, t_hw) < 8 and t_hw > lane_floor:
        t_hw = max(lane_floor, pl.cdiv(t_hw // 2, 128) * 128)

    return b_t, t_hw


def spatial_se_layer(x_nchw, conv_w, conv_b, weights=None):
    """Spatial SE: x * sigmoid(Conv2d(C, 1, 1)(x)).

    x_nchw: (B, C, H, W); conv_w: (C,) 1x1-conv weight; conv_b: () bias.
    If `weights` is given (the module's optional external weight), it is used
    instead of conv_w with zero bias (matches F.conv2d(input, weights)).
    """
    B, C, H, W = x_nchw.shape
    HW = H * W
    x = x_nchw.reshape(B, C, HW)

    if weights is not None:
        conv_w = weights.reshape(-1)
        conv_b = jnp.zeros((), jnp.float32)

    use_mxu = x.dtype != jnp.float32
    if use_mxu:
        w = conv_w.reshape(1, C).astype(x.dtype)       # (1, C) row for MXU dot
    else:
        w = conv_w.reshape(C, 1).astype(jnp.float32)   # (C, 1) col, exact f32
    b = conv_b.reshape(1).astype(jnp.float32)

    b_t, t_hw = _choose_tiles(B, C, HW, x.dtype.itemsize)
    grid = (pl.cdiv(B, b_t), pl.cdiv(HW, t_hw))

    out = pl.pallas_call(
        _make_sse_kernel(b_t, use_mxu),
        out_shape=jax.ShapeDtypeStruct((B, C, HW), x.dtype),
        grid_spec=pltpu.PrefetchScalarGridSpec(
            num_scalar_prefetch=0,
            grid=grid,
            in_specs=[
                # (b_t, C, t_hw) activation block.
                pl.BlockSpec((b_t, C, t_hw), lambda bi, si: (bi, 0, si)),
                # Grid-invariant tiny weight block (resident in VMEM).
                pl.BlockSpec(w.shape, lambda bi, si: (0, 0)),
                # Scalar bias lives in SMEM.
                pl.BlockSpec(memory_space=pltpu.MemorySpace.SMEM),
            ],
            out_specs=pl.BlockSpec((b_t, C, t_hw), lambda bi, si: (bi, 0, si)),
        ),
        compiler_params=pltpu.CompilerParams(
            # Both grid axes independent -> 2-TC sharding on v7x.
            dimension_semantics=("parallel", "parallel"),
            # Explicit scoped-VMEM budget: safe on v5e/v6e/v7x, leaves
            # headroom over the ~8-16 MiB pipeline working set.
            vmem_limit_bytes=32 * 1024 * 1024,
        ),
    )(x, w, b)

    return out.reshape(B, C, H, W)


def _reference(x_nchw, conv_w, conv_b):
    # Pure-JAX reference of the PyTorch forward (1x1 conv -> sigmoid -> mul),
    # computed in f32, cast back to the input dtype.
    xf = x_nchw.astype(jnp.float32)
    s = jnp.einsum("bchw,c->bhw", xf, conv_w.astype(jnp.float32)) + conv_b
    sig = jax.nn.sigmoid(s)[:, None, :, :]
    return (xf * sig).astype(x_nchw.dtype)


if __name__ == "__main__":
    key = jax.random.PRNGKey(0)
    kx, kw, kb, kx2, kw2, kb2, kx4, kw4, kb4 = jax.random.split(key, 9)

    # --- Test 1: module-sized small shape, f32 (exact VPU reduce path) ----
    B, C, H, W = 2, 4, 16, 16
    x = jax.random.normal(kx, (B, C, H, W), dtype=jnp.float32)
    bound = 1.0 / jnp.sqrt(jnp.float32(C))
    conv_w = jax.random.uniform(kw, (C,), jnp.float32, -bound, bound)
    conv_b = jax.random.uniform(kb, (), jnp.float32, -bound, bound)
    out = jax.block_until_ready(spatial_se_layer(x, conv_w, conv_b))
    ref = _reference(x, conv_w, conv_b)
    assert out.shape == (B, C, H, W)
    assert jnp.allclose(out, ref, atol=1e-5, rtol=1e-5)

    # --- Test 2: multi-tile spatial grid with a partial last lane tile ----
    B2, C2, H2, W2 = 2, 16, 40, 40         # HW=1600 -> 512-lane tiles + 64 partial
    x2 = jax.random.normal(kx2, (B2, C2, H2, W2), dtype=jnp.float32)
    bound2 = 1.0 / jnp.sqrt(jnp.float32(C2))
    conv_w2 = jax.random.uniform(kw2, (C2,), jnp.float32, -bound2, bound2)
    conv_b2 = jax.random.uniform(kb2, (), jnp.float32, -bound2, bound2)
    out2 = jax.block_until_ready(spatial_se_layer(x2, conv_w2, conv_b2))
    ref2 = _reference(x2, conv_w2, conv_b2)
    assert jnp.allclose(out2, ref2, atol=1e-5, rtol=1e-5)

    # --- Test 3: bf16 activations -> MXU reduce, storage-dtype re-weight --
    x_bf = x.astype(jnp.bfloat16)
    out_bf = jax.block_until_ready(spatial_se_layer(x_bf, conv_w, conv_b))
    ref_bf = _reference(x_bf, conv_w, conv_b)
    assert out_bf.dtype == jnp.bfloat16
    assert jnp.allclose(out_bf.astype(jnp.float32), ref_bf.astype(jnp.float32),
                        atol=2e-2, rtol=2e-2)

    # --- Test 4: batch-tiled blocks (b_t>1) with a partial last batch block
    B4, C4, H4, W4 = 15, 8, 32, 32          # -> b_t=2, 8 grid steps, 15 = 7*2+1
    x4 = jax.random.normal(kx4, (B4, C4, H4, W4), dtype=jnp.float32)
    bound4 = 1.0 / jnp.sqrt(jnp.float32(C4))
    conv_w4 = jax.random.uniform(kw4, (C4,), jnp.float32, -bound4, bound4)
    conv_b4 = jax.random.uniform(kb4, (), jnp.float32, -bound4, bound4)
    out4 = jax.block_until_ready(spatial_se_layer(x4, conv_w4, conv_b4))
    ref4 = _reference(x4, conv_w4, conv_b4)
    assert jnp.allclose(out4, ref4, atol=1e-5, rtol=1e-5)

    print("KERNEL_OK")
</pallas_src>

<mosaic_0001>
module attributes {stable_mosaic.version = 11 : i64} {
  func.func @kernel(%arg0: i32, %arg1: i32, %arg2: memref<1x4x256xf32, #tpu.memory_space<vmem>>, %arg3: memref<4x1xf32, #tpu.memory_space<vmem>>, %arg4: memref<1xf32, #tpu.memory_space<smem>>, %arg5: memref<1x4x256xf32, #tpu.memory_space<vmem>>) attributes {dimension_semantics = [#tpu.dimension_semantics<parallel>, #tpu.dimension_semantics<parallel>], iteration_bounds = array<i64: 2, 1>, scalar_prefetch = 0 : i64, scratch_operands = 0 : i64, tpu.core_type = #tpu.core_type<tc>, window_params = [{transform_indices = @transform_0, window_bounds = array<i64: 1, 4, 256>}, {pipeline_mode = #tpu.pipeline_mode<synchronous>, transform_indices = @transform_1, window_bounds = array<i64: 4, 1>}, {transform_indices = @transform_2, window_bounds = array<i64: 1>}, {transform_indices = @transform_3, window_bounds = array<i64: 1, 4, 256>}]} {
    %c0 = arith.constant 0 : index
    %0 = memref.load %arg4[%c0] : memref<1xf32, #tpu.memory_space<smem>>
    %c0_0 = arith.constant 0 : index
    %c0_1 = arith.constant 0 : index
    %1 = vector.load %arg3[%c0_0, %c0_1] : memref<4x1xf32, #tpu.memory_space<vmem>>, vector<4x1xf32>
    %c0_2 = arith.constant 0 : index
    %c0_3 = arith.constant 0 : index
    %c0_4 = arith.constant 0 : index
    %2 = vector.load %arg2[%c0_2, %c0_3, %c0_4] : memref<1x4x256xf32, #tpu.memory_space<vmem>>, vector<1x4x256xf32>
    %3 = vector.shape_cast %2 : vector<1x4x256xf32> to vector<4x256xf32>
    %4 = vector.broadcast %1 : vector<4x1xf32> to vector<4x256xf32>
    %5 = arith.mulf %3, %4 : vector<4x256xf32>
    %cst = arith.constant dense<0.000000e+00> : vector<256xf32>
    %6 = vector.multi_reduction <add>, %5, %cst [0] : vector<4x256xf32> to vector<256xf32>
    %7 = vector.shape_cast %6 : vector<256xf32> to vector<1x256xf32>
    %8 = vector.broadcast %0 : f32 to vector<1x256xf32>
    %9 = arith.addf %7, %8 : vector<1x256xf32>
    %10 = arith.negf %9 : vector<1x256xf32>
    %11 = math.exp %10 : vector<1x256xf32>
    %cst_5 = arith.constant 1.000000e+00 : f32
    %12 = vector.broadcast %cst_5 : f32 to vector<1x256xf32>
    %13 = arith.addf %12, %11 : vector<1x256xf32>
    %14 = arith.divf %12, %13 : vector<1x256xf32>
    %15 = vector.broadcast %14 : vector<1x256xf32> to vector<4x256xf32>
    %16 = arith.mulf %3, %15 : vector<4x256xf32>
    %c0_6 = arith.constant 0 : index
    %c0_7 = arith.constant 0 : index
    %c0_8 = arith.constant 0 : index
    %17 = vector.load %arg5[%c0_6, %c0_7, %c0_8] : memref<1x4x256xf32, #tpu.memory_space<vmem>>, vector<1x4x256xf32>
    %18 = vector.shape_cast %17 : vector<1x4x256xf32> to vector<4x256xf32>
    %19 = vector.shape_cast %16 : vector<4x256xf32> to vector<1x4x256xf32>
    tpu.vector_store %arg5[%c0_6, %c0_7, %c0_8], %19 {strides = array<i32>} : memref<1x4x256xf32, #tpu.memory_space<vmem>>, vector<1x4x256xf32>,
    return
  }
  func.func @transform_0(%arg0: i32, %arg1: i32) -> (i32, i32, i32) {
    %c0_i32 = arith.constant 0 : i32
    %c0_i32_0 = arith.constant 0 : i32
    return %arg0, %c0_i32, %arg1 : i32, i32, i32
  }
  func.func @transform_1(%arg0: i32, %arg1: i32) -> (i32, i32) {
    %c0_i32 = arith.constant 0 : i32
    %c0_i32_0 = arith.constant 0 : i32
    %c0_i32_1 = arith.constant 0 : i32
    return %c0_i32, %c0_i32_0 : i32, i32
  }
  func.func @transform_2(%arg0: i32, %arg1: i32) -> i32 {
    %c0_i32 = arith.constant 0 : i32
    %c0_i32_0 = arith.constant 0 : i32
    return %c0_i32 : i32
  }
  func.func @transform_3(%arg0: i32, %arg1: i32) -> (i32, i32, i32) {
    %c0_i32 = arith.constant 0 : i32
    %c0_i32_0 = arith.constant 0 : i32
    return %arg0, %c0_i32, %arg1 : i32, i32, i32
  }
}

</mosaic_0001>

<llo_original>
// kernel: tpu_custom_call.1
$region0: #{tpu_custom_call.1}
  #allocation0 [shape = 'u32[]', space=smem, size = 0x4, offset = 0x4, fixed_abs, tag = 'smem constant byte address 0x4 - core index']
  #allocation1 [shape = 'u32[144,128]{1,0:T(1,128)}', space=vmem, size = 0x12000, scoped, tag = 'internal scratch']
  #allocation2 [shape = 'f32[1]{0:T(128)S(6)}', space=smem, size = 0x200, scoped, tag = 'scoped memory for tpu_custom_call.1']
  %s0 = inlined_call_operand.hbm [shape: f32[2,4,256], index: 0, kind: input, shape index: {}]
  %s1 = inlined_call_operand.vmem [shape: f32[4,1], index: 1, kind: input, shape index: {}]
  %s2 = inlined_call_operand.<no memory space> [shape: f32[1], index: 2, kind: input, shape index: {}]
  %s3 = inlined_call_operand.hbm [shape: f32[2,4,256], index: 3, kind: output, shape index: {}]
  %s4 = sld [smem:[#allocation0]]
  $region49: #{tpu_custom_call.1} parent=0
    _
  %s6 = ssub.s32 1, %s4
  %s7 = scalar_select 0, %s6, %s4
  %8 = sst [smem:[#allocation2]] %s2
  $region1: #{tpu_custom_call.1} parent=0
    #allocation3 [shape = 'u8[8192]{0}', space=vmem, size = 0x2000, scoped, tag = 'input window, operand 0']
    #allocation4 [shape = 's32[2]{0}', space=sflag, size = 0x8, scoped, tag = 'scoped memory for tpu_custom_call.1']
    #allocation5 [shape = 's32[2]{0}', space=sflag, size = 0x8, scoped, tag = 'scoped memory for tpu_custom_call.1']
    #allocation6 [shape = 'u8[8192]{0}', space=vmem, size = 0x2000, scoped, tag = 'output window, operand 0']
    %9 = vsyncpa [#allocation4], 0
    %s10 = scalar_lea.sflag [#allocation4], 1
    %11 = vsyncpa %s10, 0
    %12 = vsyncpa [#allocation5], 0
    %s13 = scalar_lea.sflag [#allocation5], 1
    %14 = vsyncpa %s13, 0
    loop: start=0, step=1, limit=4
    $region2: #{tpu_custom_call.1} parent=1 // loop_pre_header
      _
    $region3: #{tpu_custom_call.1} parent=1 // loop_header
      %s16 = sphi 0, %s20
      %p17 = scmp.ge.s32.totalorder %s16, 4
      %s23 = sphi 0, %s35
      %s24 = sphi 0, %s31
      %s25 = sphi 0, %s23
      %s26 = sphi 0, %s24
      %s27 = sphi 0, %s25
      %s28 = sphi 0, %s26
      %s40 = sphi 0, %s42
      %s43 = sphi 0, %s40
      %s44 = sphi 0, %s43
      %s60 = sphi 0, %s44
      %s64 = sphi 0, %s64
      %s66 = sphi 0, %s64
      %s67 = sphi 0, %s66
      %s81 = sphi 0, %s67
      %s85 = sphi 0, %s85
      %s87 = sphi 0, %s85
      %s88 = sphi 0, %s87
      %s102 = sphi 0, %s88
      %s110 = sphi 0, %s112
      %s113 = sphi 0, %s110
      %s114 = sphi 0, %s113
      %s130 = sphi 0, %s114
    $region4: #{tpu_custom_call.1} parent=1 // loop_header_branch
      %19 = sbr.rel (%p17) target = $region8
    $region5: #{tpu_custom_call.1} parent=1 // loop_body
      %s21 = ssub.s32 %s16, 1
      %s22 = ssub.s32 %s16, 2
      %s29 = sadd.s32 1, %s24
      %p30 = scmp.ge.s32.totalorder %s29, 1
      %s31 = scalar_select %p30, 0, %s29
      %s32 = sadd.s32 1, %s23
      %s33 = scalar_select %p30, %s32, %s23
      %p34 = scmp.ge.s32.totalorder %s33, 2
      %s35 = scalar_select %p34, 0, %s33
      %s36 = ssub.s32 %s23, %s35
      %s37 = ssub.s32 %s24, %s31
      %s38 = sor.u32 %s36, %s37
      %p39 = scmp.eq.s32.totalorder %s38, 0
      %s41 = sadd.s32 %s40, 1
      %s42 = scalar_select %p39, %s40, %s41
      %p45 = pneg %p39
      %p46 = scmp.eq.s32.totalorder %s16, 1
      %p47 = por %p45, %p46
      %p48 = scmp.ne.s32.totalorder %s40, %s43
      %p49 = scmp.eq.s32.totalorder %s16, 0
      %p50 = por %p48, %p49
      %p51 = scmp.ne.s32.totalorder %s40, %s43
      %p52 = scmp.eq.s32.totalorder %s21, 1
      %p53 = por %p51, %p52
      %p54 = scmp.ne.s32.totalorder %s43, %s44
      %p55 = scmp.eq.s32.totalorder %s21, 0
      %p56 = por %p54, %p55
      %p57 = scmp.ne.s32.totalorder %s43, %s44
      %p58 = scmp.eq.s32.totalorder %s22, 1
      %p59 = por %p57, %p58
      %p61 = scmp.ne.s32.totalorder %s44, %s60
      %p62 = scmp.eq.s32.totalorder %s22, 0
      %p63 = por %p61, %p62
      %s65 = sadd.s32 %s64, 1
      %p68 = scmp.eq.s32.totalorder %s16, 1
      %p69 = scmp.ne.s32.totalorder %s64, %s66
      %p70 = scmp.eq.s32.totalorder %s16, 0
      %p71 = por %p69, %p70
      %p72 = scmp.ne.s32.totalorder %s64, %s66
      %p73 = scmp.eq.s32.totalorder %s21, 1
      %p74 = por %p72, %p73
      %p75 = scmp.ne.s32.totalorder %s66, %s67
      %p76 = scmp.eq.s32.totalorder %s21, 0
      %p77 = por %p75, %p76
      %p78 = scmp.ne.s32.totalorder %s66, %s67
      %p79 = scmp.eq.s32.totalorder %s22, 1
      %p80 = por %p78, %p79
      %p82 = scmp.ne.s32.totalorder %s67, %s81
      %p83 = scmp.eq.s32.totalorder %s22, 0
      %p84 = por %p82, %p83
      %s86 = sadd.s32 %s85, 1
      %p89 = scmp.eq.s32.totalorder %s16, 1
      %p90 = scmp.ne.s32.totalorder %s85, %s87
      %p91 = scmp.eq.s32.totalorder %s16, 0
      %p92 = por %p90, %p91
      %p93 = scmp.ne.s32.totalorder %s85, %s87
      %p94 = scmp.eq.s32.totalorder %s21, 1
      %p95 = por %p93, %p94
      %p96 = scmp.ne.s32.totalorder %s87, %s88
      %p97 = scmp.eq.s32.totalorder %s21, 0
      %p98 = por %p96, %p97
      %p99 = scmp.ne.s32.totalorder %s87, %s88
      %p100 = scmp.eq.s32.totalorder %s22, 1
      %p101 = por %p99, %p100
      %p103 = scmp.ne.s32.totalorder %s88, %s102
      %p104 = scmp.eq.s32.totalorder %s22, 0
      %p105 = por %p103, %p104
      %s106 = ssub.s32 %s23, %s35
      %s107 = ssub.s32 %s24, %s31
      %s108 = sor.u32 %s106, %s107
      %p109 = scmp.eq.s32.totalorder %s108, 0
      %s111 = sadd.s32 %s110, 1
      %s112 = scalar_select %p109, %s110, %s111
      %p115 = pneg %p109
      %p116 = scmp.eq.s32.totalorder %s16, 1
      %p117 = por %p115, %p116
      %p118 = scmp.ne.s32.totalorder %s110, %s113
      %p119 = scmp.eq.s32.totalorder %s16, 0
      %p120 = por %p118, %p119
      %p121 = scmp.ne.s32.totalorder %s110, %s113
      %p122 = scmp.eq.s32.totalorder %s21, 1
      %p123 = por %p121, %p122
      %p124 = scmp.ne.s32.totalorder %s113, %s114
      %p125 = scmp.eq.s32.totalorder %s21, 0
      %p126 = por %p124, %p125
      %p127 = scmp.ne.s32.totalorder %s113, %s114
      %p128 = scmp.eq.s32.totalorder %s22, 1
      %p129 = por %p127, %p128
      %p131 = scmp.ne.s32.totalorder %s114, %s130
      %p132 = scmp.eq.s32.totalorder %s22, 0
      %p133 = por %p131, %p132
      %p134 = scmp.le.s32.totalorder 1, %s16
      %p135 = scmp.lt.s32.totalorder %s16, 3
      %p136 = pnand %p134, %p135
      %p137 = pneg %p136
      // Predicated region
      $region9: #{tpu_custom_call.1} parent=5 // pred_check
        _
      $region10: #{tpu_custom_call.1} parent=5 // pred_check_branch
        %139 = sbr.rel (%p136) target = $region12
      $region11: #{tpu_custom_call.1} parent=5 // pred_region
        %s140 = ssub.s32 %s16, 1
        // Predicated region
        $region13: #{tpu_custom_call.1} parent=11 // pred_check
          %p141 = pneg %p77
        $region14: #{tpu_custom_call.1} parent=11 // pred_check_branch
          %143 = sbr.rel (%p141) target = $region16
        $region15: #{tpu_custom_call.1} parent=11 // pred_region
          _
        $region16: #{tpu_custom_call.1} parent=11 // pred_fallthru
          _
        // Predicated region
        $region17: #{tpu_custom_call.1} parent=11 // pred_check
          %p144 = pneg %p98
        $region18: #{tpu_custom_call.1} parent=11 // pred_check_branch
          %146 = sbr.rel (%p144) target = $region20
        $region19: #{tpu_custom_call.1} parent=11 // pred_region
          _
        $region20: #{tpu_custom_call.1} parent=11 // pred_fallthru
          _
      $region12: #{tpu_custom_call.1} parent=5 // pred_fallthru
        _
      %p147 = scmp.lt.s32.totalorder %s16, 2
      // Predicated region
      $region21: #{tpu_custom_call.1} parent=5 // pred_check
        %p148 = pneg %p147
      $region22: #{tpu_custom_call.1} parent=5 // pred_check_branch
        %150 = sbr.rel (%p148) target = $region24
      $region23: #{tpu_custom_call.1} parent=5 // pred_region
        // Predicated region
        $region25: #{tpu_custom_call.1} parent=23 // pred_check
          %p151 = pneg %p50
        $region26: #{tpu_custom_call.1} parent=23 // pred_check_branch
          %153 = sbr.rel (%p151) target = $region28
        $region27: #{tpu_custom_call.1} parent=23 // pred_region
          %s154 = sand.u32 %s40, 1
          %s155 = scalar_lea.sflag [#allocation4], %s154
          %s156 = sand.u32 %s40, 1
          %s157 = smul.addr %s156, 8
          %s158 = scalar_lea.vmem [#allocation3], %s157
          %s159 = smul.u32 2, %s24
          %s161 = ssub.s32 128, 128
          %162 = vsyncadd %s155, %s161
          %s163 = smul.addr %s23, 2
          %s164 = sadd.s32 %s159, %s163
          %s165 = smul.addr %s164, 64
          %s166 = scalar_lea.hbm %s0, %s165
          %s168 = sshll.u32 %s158, 4
          %s169 = int_to_ptr.vmem [resolvable:$true] %s168
          %171 = dma.hbm_to_vmem [thread:$0]  %s166, 128, %s169, %s155
        $region28: #{tpu_custom_call.1} parent=23 // pred_fallthru
          _
      $region24: #{tpu_custom_call.1} parent=5 // pred_fallthru
        _
      %p172 = scmp.le.s32.totalorder 1, %s16
      %p173 = scmp.lt.s32.totalorder %s16, 3
      %p174 = pnand %p172, %p173
      %p175 = pneg %p174
      // Predicated region
      $region29: #{tpu_custom_call.1} parent=5 // pred_check
        _
      $region30: #{tpu_custom_call.1} parent=5 // pred_check_branch
        %177 = sbr.rel (%p174) target = $region32
      $region31: #{tpu_custom_call.1} parent=5 // pred_region
        %s178 = ssub.s32 %s16, 1
        %s179 = sand.u32 %s43, 1
        %s180 = scalar_lea.sflag [#allocation4], %s179
        %s181 = sand.u32 %s43, 1
        %s182 = smul.addr %s181, 8
        %s183 = scalar_lea.vmem [#allocation3], %s182
        // Predicated region
        $region33: #{tpu_custom_call.1} parent=31 // pred_check
          %p184 = pneg %p56
        $region34: #{tpu_custom_call.1} parent=31 // pred_check_branch
          %186 = sbr.rel (%p184) target = $region36
        $region35: #{tpu_custom_call.1} parent=31 // pred_region
          %187 = dma.done %s180, 128
        $region36: #{tpu_custom_call.1} parent=31 // pred_fallthru
          _
        %s188 = sand.u32 %s43, 1
        %s189 = scalar_lea.sflag [#allocation4], %s188
        %s190 = sand.u32 %s43, 1
        %s191 = smul.addr %s190, 8
        %s192 = scalar_lea.vmem [#allocation3], %s191
        %p193 = pneg %p56
        %p194 = pneg %p53
        %p195 = pneg %p77
        %p196 = pneg %p74
        %p197 = pneg %p98
        %p198 = pneg %p95
        %p199 = pneg %p126
        %p200 = pneg %p123
        %s201 = sand.u32 %s113, 1
        %s202 = scalar_lea.sflag [#allocation5], %s201
        %s203 = sand.u32 %s113, 1
        %s204 = smul.addr %s203, 8
        %s205 = scalar_lea.vmem [#allocation6], %s204
        %s206 = smul.u32 2, %s26
        %s207 = smul.u32 2, %s26
        %s208 = sld [smem:[#allocation2]]
        %v209 = vld [vmem:[%s1] sm:$0xf]
        %v210 = vld [vmem:[%s183] sm:$0xff]
        %212 = vset.pattern.permute.xlu0 0
        %213 = vperm.xlu0 %212, %v209
        %v214 = vpop.permute.xlu0 %213
        %v216 = vunpack.c.l.s4 839922192
        %v217 = vunpack.c.0.s8 %v216
        %v218 = vlaneseq
        %v219 = vshrl.u32 %v218, 7
        %v220 = vsub.s32 %v217, %v219
        %v221 = vrot.slane %v214, %v220
        %v223 = vmul.f32 %v210, %v221
        %v225 = vcombine.high %v223, %v223
        %vm227 = vcmask 1043456
        %v228 = vsel %vm227, %v223, 0.0
        %v229 = vrot.slane %v228, 4
        %v230 = vadd.f32 %v228, %v229
        %v231 = vrot.slane %v230, 2
        %v232 = vadd.f32 %v230, %v231
        %v233 = vrot.slane %v232, 1
        %v234 = vadd.f32 %v232, %v233
        %v235 = vsel %vm227, %v225, 0.0
        %v236 = vrot.slane %v235, 4
        %v237 = vadd.f32 %v235, %v236
        %v238 = vrot.slane %v237, 2
        %v239 = vadd.f32 %v237, %v238
        %v240 = vrot.slane %v239, 1
        %v241 = vadd.f32 %v239, %v240
        %v242 = vstv %s208
        %v243 = vadd.f32 %v234, %v242
        %v244 = vadd.f32 %v241, %v242
        %v245 = vxor.u32 %v243, 2147483648
        %v246 = vxor.u32 %v244, 2147483648
        %v247 = vmul.f32 %v245, 1.442695
        %v248 = vpow.pop %v247
        %v249 = vmul.f32 %v246, 1.442695
        %v250 = vpow.pop %v249
        %v251 = vadd.f32 %v248, 1.0
        %v252 = vadd.f32 %v250, 1.0
        %v253 = vrcp.pop %v251
        %v254 = vmul.f32 1.0, %v253
        %v255 = vrcp.pop %v252
        %v256 = vmul.f32 1.0, %v255
        %v259 = vcombine.low %v254, %v256
        %v261 = vmul.f32 %v210, %v259
        %262 = vst [vmem:[%s205] sm:$0xff] %v261
        %s263 = sand.u32 %s113, 1
        %s264 = scalar_lea.sflag [#allocation5], %s263
        %s265 = sand.u32 %s113, 1
        %s266 = smul.addr %s265, 8
        %s267 = scalar_lea.vmem [#allocation6], %s266
        // Predicated region
        $region37: #{tpu_custom_call.1} parent=31 // pred_check
          %p268 = pneg %p123
        $region38: #{tpu_custom_call.1} parent=31 // pred_check_branch
          %270 = sbr.rel (%p268) target = $region40
        $region39: #{tpu_custom_call.1} parent=31 // pred_region
          %s271 = smul.u32 2, %s26
          %s273 = ssub.s32 128, 128
          %274 = vsyncadd %s264, %s273
          %s275 = smul.addr %s25, 2
          %s276 = sadd.s32 %s271, %s275
          %s277 = smul.addr %s276, 64
          %s278 = scalar_lea.hbm %s3, %s277
          %s280 = sshll.u32 %s267, 4
          %s281 = int_to_ptr.vmem [resolvable:$true] %s280
          %283 = dma.vmem_to_hbm [thread:$0]  %s281, 128, %s278, %s264
        $region40: #{tpu_custom_call.1} parent=31 // pred_fallthru
          _
      $region32: #{tpu_custom_call.1} parent=5 // pred_fallthru
        _
      %p284 = scmp.le.s32.totalorder 2, %s16
      // Predicated region
      $region41: #{tpu_custom_call.1} parent=5 // pred_check
        %p285 = pneg %p284
      $region42: #{tpu_custom_call.1} parent=5 // pred_check_branch
        %287 = sbr.rel (%p285) target = $region44
      $region43: #{tpu_custom_call.1} parent=5 // pred_region
        %s288 = ssub.s32 %s16, 2
        // Predicated region
        $region45: #{tpu_custom_call.1} parent=43 // pred_check
          %p289 = pneg %p129
        $region46: #{tpu_custom_call.1} parent=43 // pred_check_branch
          %291 = sbr.rel (%p289) target = $region48
        $region47: #{tpu_custom_call.1} parent=43 // pred_region
          %s292 = sand.u32 %s114, 1
          %s293 = scalar_lea.sflag [#allocation5], %s292
          %s294 = sand.u32 %s114, 1
          %s295 = smul.addr %s294, 8
          %s296 = scalar_lea.vmem [#allocation6], %s295
          %297 = dma.done %s293, 128
        $region48: #{tpu_custom_call.1} parent=43 // pred_fallthru
          _
      $region44: #{tpu_custom_call.1} parent=5 // pred_fallthru
        _
    $region6: #{tpu_custom_call.1} parent=1 // loop_footer
      %s20 = sadd.s32 1, %s16
    $region7: #{tpu_custom_call.1} parent=1 // loop_footer_branch
      %15 = sbr.rel target = $region3
    $region8: #{tpu_custom_call.1} parent=1 // loop_exit
      _
    %298 = vsyncpa [#allocation4], 1
    %s299 = scalar_lea.sflag [#allocation4], 1
    %300 = vsyncpa %s299, 1
    %301 = vsyncpa [#allocation5], 1
    %s302 = scalar_lea.sflag [#allocation5], 1
    %303 = vsyncpa %s302, 1

</llo_original>
